<compile_context>
chip_gen: v6e
topology: v6e:2x2x1
jax: 0.10.0
libtpu: 0.0.40
codegen_flags: <defaults>
</compile_context>

<pallas_src>
import functools

import jax
import jax.numpy as jnp
from jax.experimental import pallas as pl
from jax.experimental.pallas import tpu as pltpu


def _qbit_kernel(x_ref, cb_ref, cbt_ref, y_ref, bits_ref, *, num_layers):
    # x_ref   : (1, C, TT) f32 -- time on lanes, channels on sublanes
    # cb_ref  : (L, 2, C)  f32 -- codebooks, codeword-major (for the sim matmul)
    # cbt_ref : (L, C, 2)  f32 -- codebooks, channel-major (for the select)
    # y_ref   : (1, C, TT) f32 -- sum over layers of selected codewords
    # bits_ref: (1, L, TT) i8  -- per-layer selected bit, lane-dense
    x_in = x_ref[0]                                  # (C, TT)
    x = x_in                                         # running residual
    bit_rows = []
    for l in range(num_layers):                      # static, unrolled residual loop
        # Both codeword similarities with one MXU matmul: (2, C) @ (C, TT) -> (2, TT).
        sim = jnp.dot(cb_ref[l], x, preferred_element_type=jnp.float32)
        # Ties -> codeword 0, exactly like argmax in the reference.
        bit = sim[1:2, :] > sim[0:1, :]              # (1, TT) bool
        # Exact one-hot select (== attn @ codebook), single VPU select per element.
        y = jnp.where(bit, cbt_ref[l, :, 1:2], cbt_ref[l, :, 0:1])   # (C, TT)
        x = x - y                                    # residual for the next layer
        bit_rows.append(bit.astype(jnp.int32))
    # Sum of selected codewords == input minus final residual (no acc register).
    y_ref[0] = x_in - x
    # Single lane-dense store of all L bit rows, narrowed to int8 once.
    bits_ref[0] = jnp.concatenate(bit_rows, axis=0).astype(jnp.int8)   # (L, TT)


def _pick_time_tile(T, B, *, cap=1024, min_steps=8):
    """Lane-dense time tile: multiple of 128 dividing T, <= cap (vreg pressure),
    shrunk so B * (T // TT) >= min_steps when possible (v7x: 2 TCs + pipelining)."""
    cands = [tt for tt in range(cap, 127, -128) if tt <= T and T % tt == 0]
    if not cands:
        # Full-extent block: legal for any T when block == full dim.
        # TODO(synk): very long non-128-divisible T could exceed the v7x scoped
        # VMEM budget with this single-block fallback; needs masked tiling.
        return T
    for tt in cands:                                  # largest first
        if B * (T // tt) >= min_steps:
            return tt
    return cands[-1]                                  # tiny input: maximize grid steps


def qbit1d_forward(x, codebooks, *, num_bits):
    """x: (B, C, T) f32; codebooks: (L, 2, C) f32. Returns (y, info)."""
    B, C, T = x.shape
    L = codebooks.shape[0]
    assert T % num_bits == 0, "time dim must be divisible by num_bits"

    TT = _pick_time_tile(T, B)
    # Channel-major copy of the (tiny) codebooks so the in-kernel select needs
    # no layout shuffles. Precomputed once in the wrapper.
    codebooks_t = jnp.transpose(codebooks, (0, 2, 1))        # (L, C, 2)

    # NOTE: x/y kept in f32 for exact parity with the reference; a bf16-I/O
    # variant (f32 math in-kernel) would halve the dominant HBM streams on v5e
    # but can shift near-tie bit decisions, so it is not enabled here.
    kernel = functools.partial(_qbit_kernel, num_layers=L)
    y, bits = pl.pallas_call(
        kernel,
        out_shape=(
            jax.ShapeDtypeStruct((B, C, T), jnp.float32),
            jax.ShapeDtypeStruct((B, L, T), jnp.int8),
        ),
        grid=(B, T // TT),
        in_specs=[
            pl.BlockSpec((1, C, TT), lambda b, t: (b, 0, t)),
            pl.BlockSpec((L, 2, C), lambda b, t: (0, 0, 0)),
            pl.BlockSpec((L, C, 2), lambda b, t: (0, 0, 0)),
        ],
        out_specs=(
            pl.BlockSpec((1, C, TT), lambda b, t: (b, 0, t)),
            pl.BlockSpec((1, L, TT), lambda b, t: (b, 0, t)),
        ),
        compiler_params=pltpu.CompilerParams(
            dimension_semantics=("parallel", "parallel"),
            vmem_limit_bytes=32 * 1024 * 1024,
        ),
    )(x, codebooks, codebooks_t)

    # Cheap glue: pack bits -> indices, reading the 4x-cheaper int8 bit stream.
    bitmask = (2 ** jnp.arange(num_bits - 1, -1, -1)).astype(jnp.int32)
    indices = jnp.sum(
        bits.reshape(B, L, T // num_bits, num_bits).astype(jnp.int32) * bitmask,
        axis=-1,
    )                                                        # (B, L, T // num_bits)
    return y, dict(indices=indices, bits=bits)


def _reference_forward(x, codebooks, *, num_bits):
    B, C, T = x.shape
    L = codebooks.shape[0]
    r = jnp.transpose(x, (0, 2, 1))                          # (B, T, C)
    acc = jnp.zeros_like(r)
    bits_all = []
    for l in range(L):
        cb = codebooks[l]                                    # (2, C)
        sim = jnp.sum(r[:, :, None, :] * cb[None, None, :, :], axis=-1)  # (B, T, 2)
        bit = jnp.argmax(sim, axis=-1)                       # (B, T), ties -> 0
        y = cb[bit]                                          # (B, T, C)
        r = r - y
        acc = acc + y
        bits_all.append(bit)
    bits = jnp.stack(bits_all, axis=1).astype(jnp.int32)     # (B, L, T)
    bitmask = (2 ** jnp.arange(num_bits - 1, -1, -1)).astype(jnp.int32)
    indices = jnp.sum(
        bits.reshape(B, L, T // num_bits, num_bits) * bitmask, axis=-1)
    return jnp.transpose(acc, (0, 2, 1)), indices, bits


if __name__ == "__main__":
    B, C, T = 2, 8, 512           # batch, channels (= features), time
    num_bits, num_layers = 8, 2   # T % num_bits == 0
    temperature = 1.0             # unused in eval-mode forward

    key = jax.random.PRNGKey(0)
    kx, kc = jax.random.split(key)
    x = jax.random.normal(kx, (B, C, T), dtype=jnp.float32)
    # Deterministic stand-in for nn.Parameter(torch.randn(2, features)) per layer.
    codebooks = jax.random.normal(kc, (num_layers, 2, C), dtype=jnp.float32)

    y, info = qbit1d_forward(x, codebooks, num_bits=num_bits)
    jax.block_until_ready((y, info["indices"], info["bits"]))

    y_exp, idx_exp, bits_exp = _reference_forward(x, codebooks, num_bits=num_bits)
    assert y.shape == (B, C, T)
    assert info["bits"].shape == (B, num_layers, T)
    assert info["indices"].shape == (B, num_layers, T // num_bits)
    assert jnp.array_equal(info["bits"].astype(jnp.int32), bits_exp)
    assert jnp.array_equal(info["indices"], idx_exp)
    assert jnp.allclose(y, y_exp, atol=1e-5)

    print("KERNEL_OK")
</pallas_src>

<mosaic_0001>
module attributes {stable_mosaic.version = 11 : i64} {
  func.func @_qbit_kernel(%arg0: i32, %arg1: i32, %arg2: memref<1x8x128xf32, #tpu.memory_space<vmem>>, %arg3: memref<2x2x8xf32, #tpu.memory_space<vmem>>, %arg4: memref<2x8x2xf32, #tpu.memory_space<vmem>>, %arg5: memref<1x8x128xf32, #tpu.memory_space<vmem>>, %arg6: memref<1x2x128xi8, #tpu.memory_space<vmem>>) attributes {dimension_semantics = [#tpu.dimension_semantics<parallel>, #tpu.dimension_semantics<parallel>], iteration_bounds = array<i64: 2, 4>, scalar_prefetch = 0 : i64, scratch_operands = 0 : i64, tpu.core_type = #tpu.core_type<tc>, window_params = [{transform_indices = @transform_0, window_bounds = array<i64: 1, 8, 128>}, {pipeline_mode = #tpu.pipeline_mode<synchronous>, transform_indices = @transform_1, window_bounds = array<i64: 2, 2, 8>}, {pipeline_mode = #tpu.pipeline_mode<synchronous>, transform_indices = @transform_2, window_bounds = array<i64: 2, 8, 2>}, {transform_indices = @transform_3, window_bounds = array<i64: 1, 8, 128>}, {transform_indices = @transform_4, window_bounds = array<i64: 1, 2, 128>}]} {
    %c0 = arith.constant 0 : index
    %c0_0 = arith.constant 0 : index
    %c0_1 = arith.constant 0 : index
    %0 = vector.load %arg2[%c0, %c0_0, %c0_1] : memref<1x8x128xf32, #tpu.memory_space<vmem>>, vector<1x8x128xf32>
    %1 = vector.shape_cast %0 : vector<1x8x128xf32> to vector<8x128xf32>
    %c0_2 = arith.constant 0 : index
    %c0_3 = arith.constant 0 : index
    %c0_4 = arith.constant 0 : index
    %2 = vector.load %arg3[%c0_2, %c0_3, %c0_4] : memref<2x2x8xf32, #tpu.memory_space<vmem>>, vector<1x2x8xf32>
    %3 = vector.shape_cast %2 : vector<1x2x8xf32> to vector<2x8xf32>
    %cst = arith.constant dense<0.000000e+00> : vector<2x128xf32>
    %4 = tpu.matmul %3, %1, %cst {dimension_numbers = #tpu.dot_dimension_numbers<[1], [0], [0], [1], [0, 0, 1, 1], [], []>} : vector<2x8xf32>, vector<8x128xf32>, vector<2x128xf32> -> vector<2x128xf32>
    %5 = vector.extract_strided_slice %4 {offsets = [1, 0], sizes = [1, 128], strides = [1, 1]} : vector<2x128xf32> to vector<1x128xf32>
    %6 = vector.extract_strided_slice %4 {offsets = [0, 0], sizes = [1, 128], strides = [1, 1]} : vector<2x128xf32> to vector<1x128xf32>
    %7 = arith.cmpf ogt, %5, %6 : vector<1x128xf32>
    %c0_5 = arith.constant 0 : index
    %c0_6 = arith.constant 0 : index
    %c1 = arith.constant 1 : index
    %8 = vector.load %arg4[%c0_5, %c0_6, %c1] : memref<2x8x2xf32, #tpu.memory_space<vmem>>, vector<1x8x1xf32>
    %9 = vector.shape_cast %8 : vector<1x8x1xf32> to vector<8x1xf32>
    %c0_7 = arith.constant 0 : index
    %c0_8 = arith.constant 0 : index
    %c0_9 = arith.constant 0 : index
    %10 = vector.load %arg4[%c0_7, %c0_8, %c0_9] : memref<2x8x2xf32, #tpu.memory_space<vmem>>, vector<1x8x1xf32>
    %11 = vector.shape_cast %10 : vector<1x8x1xf32> to vector<8x1xf32>
    %12 = vector.shape_cast %7 : vector<1x128xi1> to vector<1x128xi1>
    %13 = vector.broadcast %12 : vector<1x128xi1> to vector<8x128xi1>
    %14 = vector.shape_cast %9 : vector<8x1xf32> to vector<8x1xf32>
    %15 = vector.broadcast %14 : vector<8x1xf32> to vector<8x128xf32>
    %16 = vector.shape_cast %11 : vector<8x1xf32> to vector<8x1xf32>
    %17 = vector.broadcast %16 : vector<8x1xf32> to vector<8x128xf32>
    %18 = arith.select %13, %15, %17 : vector<8x128xi1>, vector<8x128xf32>
    %19 = arith.subf %1, %18 : vector<8x128xf32>
    %20 = arith.extui %7 : vector<1x128xi1> to vector<1x128xi32>
    %c1_10 = arith.constant 1 : index
    %c0_11 = arith.constant 0 : index
    %c0_12 = arith.constant 0 : index
    %21 = vector.load %arg3[%c1_10, %c0_11, %c0_12] : memref<2x2x8xf32, #tpu.memory_space<vmem>>, vector<1x2x8xf32>
    %22 = vector.shape_cast %21 : vector<1x2x8xf32> to vector<2x8xf32>
    %cst_13 = arith.constant dense<0.000000e+00> : vector<2x128xf32>
    %23 = tpu.matmul %22, %19, %cst_13 {dimension_numbers = #tpu.dot_dimension_numbers<[1], [0], [0], [1], [0, 0, 1, 1], [], []>} : vector<2x8xf32>, vector<8x128xf32>, vector<2x128xf32> -> vector<2x128xf32>
    %24 = vector.extract_strided_slice %23 {offsets = [1, 0], sizes = [1, 128], strides = [1, 1]} : vector<2x128xf32> to vector<1x128xf32>
    %25 = vector.extract_strided_slice %23 {offsets = [0, 0], sizes = [1, 128], strides = [1, 1]} : vector<2x128xf32> to vector<1x128xf32>
    %26 = arith.cmpf ogt, %24, %25 : vector<1x128xf32>
    %c1_14 = arith.constant 1 : index
    %c0_15 = arith.constant 0 : index
    %c1_16 = arith.constant 1 : index
    %27 = vector.load %arg4[%c1_14, %c0_15, %c1_16] : memref<2x8x2xf32, #tpu.memory_space<vmem>>, vector<1x8x1xf32>
    %28 = vector.shape_cast %27 : vector<1x8x1xf32> to vector<8x1xf32>
    %c1_17 = arith.constant 1 : index
    %c0_18 = arith.constant 0 : index
    %c0_19 = arith.constant 0 : index
    %29 = vector.load %arg4[%c1_17, %c0_18, %c0_19] : memref<2x8x2xf32, #tpu.memory_space<vmem>>, vector<1x8x1xf32>
    %30 = vector.shape_cast %29 : vector<1x8x1xf32> to vector<8x1xf32>
    %31 = vector.shape_cast %26 : vector<1x128xi1> to vector<1x128xi1>
    %32 = vector.broadcast %31 : vector<1x128xi1> to vector<8x128xi1>
    %33 = vector.shape_cast %28 : vector<8x1xf32> to vector<8x1xf32>
    %34 = vector.broadcast %33 : vector<8x1xf32> to vector<8x128xf32>
    %35 = vector.shape_cast %30 : vector<8x1xf32> to vector<8x1xf32>
    %36 = vector.broadcast %35 : vector<8x1xf32> to vector<8x128xf32>
    %37 = arith.select %32, %34, %36 : vector<8x128xi1>, vector<8x128xf32>
    %38 = arith.subf %19, %37 : vector<8x128xf32>
    %39 = arith.extui %26 : vector<1x128xi1> to vector<1x128xi32>
    %40 = arith.subf %1, %38 : vector<8x128xf32>
    %c0_20 = arith.constant 0 : index
    %c0_21 = arith.constant 0 : index
    %c0_22 = arith.constant 0 : index
    %41 = vector.load %arg5[%c0_20, %c0_21, %c0_22] : memref<1x8x128xf32, #tpu.memory_space<vmem>>, vector<1x8x128xf32>
    %42 = vector.shape_cast %41 : vector<1x8x128xf32> to vector<8x128xf32>
    %43 = vector.shape_cast %40 : vector<8x128xf32> to vector<1x8x128xf32>
    tpu.vector_store %arg5[%c0_20, %c0_21, %c0_22], %43 {strides = array<i32>} : memref<1x8x128xf32, #tpu.memory_space<vmem>>, vector<1x8x128xf32>,
    %44 = tpu.concatenate %20, %39 in 0 : vector<1x128xi32>, vector<1x128xi32> -> vector<2x128xi32>
    %45 = arith.trunci %44 : vector<2x128xi32> to vector<2x128xi8>
    %c0_23 = arith.constant 0 : index
    %c0_24 = arith.constant 0 : index
    %c0_25 = arith.constant 0 : index
    %46 = vector.load %arg6[%c0_23, %c0_24, %c0_25] : memref<1x2x128xi8, #tpu.memory_space<vmem>>, vector<1x2x128xi8>
    %47 = vector.shape_cast %46 : vector<1x2x128xi8> to vector<2x128xi8>
    %48 = vector.shape_cast %45 : vector<2x128xi8> to vector<1x2x128xi8>
    tpu.vector_store %arg6[%c0_23, %c0_24, %c0_25], %48 {strides = array<i32>} : memref<1x2x128xi8, #tpu.memory_space<vmem>>, vector<1x2x128xi8>,
    return
  }
  func.func @transform_0(%arg0: i32, %arg1: i32) -> (i32, i32, i32) {
    %c0_i32 = arith.constant 0 : i32
    %c0_i32_0 = arith.constant 0 : i32
    return %arg0, %c0_i32, %arg1 : i32, i32, i32
  }
  func.func @transform_1(%arg0: i32, %arg1: i32) -> (i32, i32, i32) {
    %c0_i32 = arith.constant 0 : i32
    %c0_i32_0 = arith.constant 0 : i32
    %c0_i32_1 = arith.constant 0 : i32
    %c0_i32_2 = arith.constant 0 : i32
    return %c0_i32, %c0_i32_0, %c0_i32_1 : i32, i32, i32
  }
  func.func @transform_2(%arg0: i32, %arg1: i32) -> (i32, i32, i32) {
    %c0_i32 = arith.constant 0 : i32
    %c0_i32_0 = arith.constant 0 : i32
    %c0_i32_1 = arith.constant 0 : i32
    %c0_i32_2 = arith.constant 0 : i32
    return %c0_i32, %c0_i32_0, %c0_i32_1 : i32, i32, i32
  }
  func.func @transform_3(%arg0: i32, %arg1: i32) -> (i32, i32, i32) {
    %c0_i32 = arith.constant 0 : i32
    %c0_i32_0 = arith.constant 0 : i32
    return %arg0, %c0_i32, %arg1 : i32, i32, i32
  }
  func.func @transform_4(%arg0: i32, %arg1: i32) -> (i32, i32, i32) {
    %c0_i32 = arith.constant 0 : i32
    %c0_i32_0 = arith.constant 0 : i32
    return %arg0, %c0_i32, %arg1 : i32, i32, i32
  }
}

</mosaic_0001>

<llo_original>
// kernel: tpu_custom_call.1
$region0: #{tpu_custom_call.1}
  #allocation0 [shape = 'u32[]', space=smem, size = 0x4, offset = 0x4, fixed_abs, tag = 'smem constant byte address 0x4 - core index']
  #allocation1 [shape = 'u32[144,128]{1,0:T(1,128)}', space=vmem, size = 0x12000, scoped, tag = 'internal scratch']
  %s0 = inlined_call_operand.hbm [shape: f32[2,8,512], index: 0, kind: input, shape index: {}]
  %s1 = inlined_call_operand.vmem [shape: f32[2,2,8], index: 1, kind: input, shape index: {}]
  %s2 = inlined_call_operand.vmem [shape: f32[2,8,2], index: 2, kind: input, shape index: {}]
  %s3 = inlined_call_operand.hbm [shape: f32[2,8,512], index: 3, kind: output, shape index: {0}]
  %s4 = inlined_call_operand.hbm [shape: s8[2,2,512], index: 4, kind: output, shape index: {1}]
  %5 = xla_tuple %s3, %s4
  %s6 = sld [smem:[#allocation0]]
  $region57: #{tpu_custom_call.1} parent=0
    _
  %s8 = ssub.s32 1, %s6
  %s9 = scalar_select 0, %s8, %s6
  $region1: #{tpu_custom_call.1} parent=0
    #allocation2 [shape = 'u8[8192]{0}', space=vmem, size = 0x2000, scoped, tag = 'input window, operand 0']
    #allocation3 [shape = 's32[2]{0}', space=sflag, size = 0x8, scoped, tag = 'scoped memory for tpu_custom_call.1']
    #allocation4 [shape = 's32[2]{0}', space=sflag, size = 0x8, scoped, tag = 'scoped memory for tpu_custom_call.1']
    #allocation5 [shape = 'u8[8192]{0}', space=vmem, size = 0x2000, scoped, tag = 'output window, operand 0']
    #allocation6 [shape = 'u8[1024]{0}', space=vmem, size = 0x400, scoped, tag = 'output window, operand 1']
    #allocation7 [shape = 's32[2]{0}', space=sflag, size = 0x8, scoped, tag = 'scoped memory for tpu_custom_call.1']
    %10 = vsyncpa [#allocation3], 0
    %s11 = scalar_lea.sflag [#allocation3], 1
    %12 = vsyncpa %s11, 0
    %13 = vsyncpa [#allocation4], 0
    %s14 = scalar_lea.sflag [#allocation4], 1
    %15 = vsyncpa %s14, 0
    %16 = vsyncpa [#allocation7], 0
    %s17 = scalar_lea.sflag [#allocation7], 1
    %18 = vsyncpa %s17, 0
    loop: start=0, step=1, limit=10
    $region2: #{tpu_custom_call.1} parent=1 // loop_pre_header
      _
    $region3: #{tpu_custom_call.1} parent=1 // loop_header
      %s20 = sphi 0, %s24
      %p21 = scmp.ge.s32.totalorder %s20, 10
      %s27 = sphi 0, %s39
      %s28 = sphi 0, %s35
      %s29 = sphi 0, %s27
      %s30 = sphi 0, %s28
      %s31 = sphi 0, %s29
      %s32 = sphi 0, %s30
      %s44 = sphi 0, %s46
      %s47 = sphi 0, %s44
      %s48 = sphi 0, %s47
      %s64 = sphi 0, %s48
      %s68 = sphi 0, %s68
      %s70 = sphi 0, %s68
      %s71 = sphi 0, %s70
      %s85 = sphi 0, %s71
      %s89 = sphi 0, %s89
      %s91 = sphi 0, %s89
      %s92 = sphi 0, %s91
      %s106 = sphi 0, %s92
      %s114 = sphi 0, %s116
      %s117 = sphi 0, %s114
      %s118 = sphi 0, %s117
      %s134 = sphi 0, %s118
      %s142 = sphi 0, %s144
      %s145 = sphi 0, %s142
      %s146 = sphi 0, %s145
      %s162 = sphi 0, %s146
    $region4: #{tpu_custom_call.1} parent=1 // loop_header_branch
      %23 = sbr.rel (%p21) target = $region8
    $region5: #{tpu_custom_call.1} parent=1 // loop_body
      %s25 = ssub.s32 %s20, 1
      %s26 = ssub.s32 %s20, 2
      %s33 = sadd.s32 1, %s28
      %p34 = scmp.ge.s32.totalorder %s33, 4
      %s35 = scalar_select %p34, 0, %s33
      %s36 = sadd.s32 1, %s27
      %s37 = scalar_select %p34, %s36, %s27
      %p38 = scmp.ge.s32.totalorder %s37, 2
      %s39 = scalar_select %p38, 0, %s37
      %s40 = ssub.s32 %s27, %s39
      %s41 = ssub.s32 %s28, %s35
      %s42 = sor.u32 %s40, %s41
      %p43 = scmp.eq.s32.totalorder %s42, 0
      %s45 = sadd.s32 %s44, 1
      %s46 = scalar_select %p43, %s44, %s45
      %p49 = pneg %p43
      %p50 = scmp.eq.s32.totalorder %s20, 7
      %p51 = por %p49, %p50
      %p52 = scmp.ne.s32.totalorder %s44, %s47
      %p53 = scmp.eq.s32.totalorder %s20, 0
      %p54 = por %p52, %p53
      %p55 = scmp.ne.s32.totalorder %s44, %s47
      %p56 = scmp.eq.s32.totalorder %s25, 7
      %p57 = por %p55, %p56
      %p58 = scmp.ne.s32.totalorder %s47, %s48
      %p59 = scmp.eq.s32.totalorder %s25, 0
      %p60 = por %p58, %p59
      %p61 = scmp.ne.s32.totalorder %s47, %s48
      %p62 = scmp.eq.s32.totalorder %s26, 7
      %p63 = por %p61, %p62
      %p65 = scmp.ne.s32.totalorder %s48, %s64
      %p66 = scmp.eq.s32.totalorder %s26, 0
      %p67 = por %p65, %p66
      %s69 = sadd.s32 %s68, 1
      %p72 = scmp.eq.s32.totalorder %s20, 7
      %p73 = scmp.ne.s32.totalorder %s68, %s70
      %p74 = scmp.eq.s32.totalorder %s20, 0
      %p75 = por %p73, %p74
      %p76 = scmp.ne.s32.totalorder %s68, %s70
      %p77 = scmp.eq.s32.totalorder %s25, 7
      %p78 = por %p76, %p77
      %p79 = scmp.ne.s32.totalorder %s70, %s71
      %p80 = scmp.eq.s32.totalorder %s25, 0
      %p81 = por %p79, %p80
      %p82 = scmp.ne.s32.totalorder %s70, %s71
      %p83 = scmp.eq.s32.totalorder %s26, 7
      %p84 = por %p82, %p83
      %p86 = scmp.ne.s32.totalorder %s71, %s85
      %p87 = scmp.eq.s32.totalorder %s26, 0
      %p88 = por %p86, %p87
      %s90 = sadd.s32 %s89, 1
      %p93 = scmp.eq.s32.totalorder %s20, 7
      %p94 = scmp.ne.s32.totalorder %s89, %s91
      %p95 = scmp.eq.s32.totalorder %s20, 0
      %p96 = por %p94, %p95
      %p97 = scmp.ne.s32.totalorder %s89, %s91
      %p98 = scmp.eq.s32.totalorder %s25, 7
      %p99 = por %p97, %p98
      %p100 = scmp.ne.s32.totalorder %s91, %s92
      %p101 = scmp.eq.s32.totalorder %s25, 0
      %p102 = por %p100, %p101
      %p103 = scmp.ne.s32.totalorder %s91, %s92
      %p104 = scmp.eq.s32.totalorder %s26, 7
      %p105 = por %p103, %p104
      %p107 = scmp.ne.s32.totalorder %s92, %s106
      %p108 = scmp.eq.s32.totalorder %s26, 0
      %p109 = por %p107, %p108
      %s110 = ssub.s32 %s27, %s39
      %s111 = ssub.s32 %s28, %s35
      %s112 = sor.u32 %s110, %s111
      %p113 = scmp.eq.s32.totalorder %s112, 0
      %s115 = sadd.s32 %s114, 1
      %s116 = scalar_select %p113, %s114, %s115
      %p119 = pneg %p113
      %p120 = scmp.eq.s32.totalorder %s20, 7
      %p121 = por %p119, %p120
      %p122 = scmp.ne.s32.totalorder %s114, %s117
      %p123 = scmp.eq.s32.totalorder %s20, 0
      %p124 = por %p122, %p123
      %p125 = scmp.ne.s32.totalorder %s114, %s117
      %p126 = scmp.eq.s32.totalorder %s25, 7
      %p127 = por %p125, %p126
      %p128 = scmp.ne.s32.totalorder %s117, %s118
      %p129 = scmp.eq.s32.totalorder %s25, 0
      %p130 = por %p128, %p129
      %p131 = scmp.ne.s32.totalorder %s117, %s118
      %p132 = scmp.eq.s32.totalorder %s26, 7
      %p133 = por %p131, %p132
      %p135 = scmp.ne.s32.totalorder %s118, %s134
      %p136 = scmp.eq.s32.totalorder %s26, 0
      %p137 = por %p135, %p136
      %s138 = ssub.s32 %s27, %s39
      %s139 = ssub.s32 %s28, %s35
      %s140 = sor.u32 %s138, %s139
      %p141 = scmp.eq.s32.totalorder %s140, 0
      %s143 = sadd.s32 %s142, 1
      %s144 = scalar_select %p141, %s142, %s143
      %p147 = pneg %p141
      %p148 = scmp.eq.s32.totalorder %s20, 7
      %p149 = por %p147, %p148
      %p150 = scmp.ne.s32.totalorder %s142, %s145
      %p151 = scmp.eq.s32.totalorder %s20, 0
      %p152 = por %p150, %p151
      %p153 = scmp.ne.s32.totalorder %s142, %s145
      %p154 = scmp.eq.s32.totalorder %s25, 7
      %p155 = por %p153, %p154
      %p156 = scmp.ne.s32.totalorder %s145, %s146
      %p157 = scmp.eq.s32.totalorder %s25, 0
      %p158 = por %p156, %p157
      %p159 = scmp.ne.s32.totalorder %s145, %s146
      %p160 = scmp.eq.s32.totalorder %s26, 7
      %p161 = por %p159, %p160
      %p163 = scmp.ne.s32.totalorder %s146, %s162
      %p164 = scmp.eq.s32.totalorder %s26, 0
      %p165 = por %p163, %p164
      %p166 = scmp.le.s32.totalorder 1, %s20
      %p167 = scmp.lt.s32.totalorder %s20, 9
      %p168 = pnand %p166, %p167
      %p169 = pneg %p168
      // Predicated region
      $region9: #{tpu_custom_call.1} parent=5 // pred_check
        _
      $region10: #{tpu_custom_call.1} parent=5 // pred_check_branch
        %171 = sbr.rel (%p168) target = $region12
      $region11: #{tpu_custom_call.1} parent=5 // pred_region
        %s172 = ssub.s32 %s20, 1
        // Predicated region
        $region13: #{tpu_custom_call.1} parent=11 // pred_check
          %p173 = pneg %p81
        $region14: #{tpu_custom_call.1} parent=11 // pred_check_branch
          %175 = sbr.rel (%p173) target = $region16
        $region15: #{tpu_custom_call.1} parent=11 // pred_region
          _
        $region16: #{tpu_custom_call.1} parent=11 // pred_fallthru
          _
        // Predicated region
        $region17: #{tpu_custom_call.1} parent=11 // pred_check
          %p176 = pneg %p102
        $region18: #{tpu_custom_call.1} parent=11 // pred_check_branch
          %178 = sbr.rel (%p176) target = $region20
        $region19: #{tpu_custom_call.1} parent=11 // pred_region
          _
        $region20: #{tpu_custom_call.1} parent=11 // pred_fallthru
          _
      $region12: #{tpu_custom_call.1} parent=5 // pred_fallthru
        _
      %p179 = scmp.lt.s32.totalorder %s20, 8
      // Predicated region
      $region21: #{tpu_custom_call.1} parent=5 // pred_check
        %p180 = pneg %p179
      $region22: #{tpu_custom_call.1} parent=5 // pred_check_branch
        %182 = sbr.rel (%p180) target = $region24
      $region23: #{tpu_custom_call.1} parent=5 // pred_region
        // Predicated region
        $region25: #{tpu_custom_call.1} parent=23 // pred_check
          %p183 = pneg %p54
        $region26: #{tpu_custom_call.1} parent=23 // pred_check_branch
          %185 = sbr.rel (%p183) target = $region28
        $region27: #{tpu_custom_call.1} parent=23 // pred_region
          %s186 = sand.u32 %s44, 1
          %s187 = scalar_lea.sflag [#allocation3], %s186
          %s188 = sand.u32 %s44, 1
          %s189 = smul.addr %s188, 8
          %s190 = scalar_lea.vmem [#allocation2], %s189
          %s192 = ssub.s32 128, 128
          %193 = vsyncadd %s187, %s192
          %s194 = smul.addr %s27, 4
          %s195 = sadd.s32 %s28, %s194
          %s196 = smul.addr %s195, 128
          %s197 = scalar_lea.hbm %s0, %s196
          %s199 = sshll.u32 %s190, 4
          %s200 = int_to_ptr.vmem [resolvable:$true] %s199
          %202 = dma.hbm_to_vmem [thread:$0]  %s197, 128, %s200, %s187
        $region28: #{tpu_custom_call.1} parent=23 // pred_fallthru
          _
      $region24: #{tpu_custom_call.1} parent=5 // pred_fallthru
        _
      %p203 = scmp.le.s32.totalorder 1, %s20
      %p204 = scmp.lt.s32.totalorder %s20, 9
      %p205 = pnand %p203, %p204
      %p206 = pneg %p205
      // Predicated region
      $region29: #{tpu_custom_call.1} parent=5 // pred_check
        _
      $region30: #{tpu_custom_call.1} parent=5 // pred_check_branch
        %208 = sbr.rel (%p205) target = $region32
      $region31: #{tpu_custom_call.1} parent=5 // pred_region
        %s209 = ssub.s32 %s20, 1
        %s210 = sand.u32 %s47, 1
        %s211 = scalar_lea.sflag [#allocation3], %s210
        %s212 = sand.u32 %s47, 1
        %s213 = smul.addr %s212, 8
        %s214 = scalar_lea.vmem [#allocation2], %s213
        // Predicated region
        $region33: #{tpu_custom_call.1} parent=31 // pred_check
          %p215 = pneg %p60
        $region34: #{tpu_custom_call.1} parent=31 // pred_check_branch
          %217 = sbr.rel (%p215) target = $region36
        $region35: #{tpu_custom_call.1} parent=31 // pred_region
          %218 = dma.done %s211, 128
        $region36: #{tpu_custom_call.1} parent=31 // pred_fallthru
          _
        %s219 = sand.u32 %s47, 1
        %s220 = scalar_lea.sflag [#allocation3], %s219
        %s221 = sand.u32 %s47, 1
        %s222 = smul.addr %s221, 8
        %s223 = scalar_lea.vmem [#allocation2], %s222
        %p224 = pneg %p60
        %p225 = pneg %p57
        %p226 = pneg %p81
        %p227 = pneg %p78
        %p228 = pneg %p102
        %p229 = pneg %p99
        %p230 = pneg %p130
        %p231 = pneg %p127
        %s232 = sand.u32 %s117, 1
        %s233 = scalar_lea.sflag [#allocation4], %s232
        %s234 = sand.u32 %s117, 1
        %s235 = smul.addr %s234, 8
        %s236 = scalar_lea.vmem [#allocation5], %s235
        %p237 = pneg %p158
        %p238 = pneg %p155
        %s239 = sand.u32 %s145, 1
        %s240 = scalar_lea.sflag [#allocation7], %s239
        %s241 = sand.u32 %s145, 1
        %s242 = scalar_lea.vmem [#allocation6], %s241
        %v243 = vld [vmem:[%s214] sm:$0xff]
        %v244 = vld [vmem:[%s1] sm:$0x3]
        %vm245 = vcmask 64512
        %v247 = vsel %vm245, %v244, 0
        %249 = vmatprep.subr.mxu0 0.0
        %250 = vmatpush1.msra.mxu0 0.0
        %251 = vmatprep.subr.mxu0 0.0
        %252 = vmatpush1.msra.mxu0 0.0
        %253 = vmatprep.subr.mxu0 0.0
        %254 = vmatpush1.msra.mxu0 0.0
        %255 = vmatprep.subr.mxu0 0.0
        %256 = vmatpush1.msra.mxu0 0.0
        %257 = vmatprep.subr.mxu0 0.0
        %258 = vmatpush1.msra.mxu0 0.0
        %259 = vmatprep.subr.mxu0 0.0
        %260 = vmatpush1.msra.mxu0 0.0
        %261 = vmatprep.subr.mxu0 0.0
        %262 = vmatpush1.msra.mxu0 0.0
        %263 = vmatprep.subr.mxu0 0.0
        %264 = vmatpush1.msra.mxu0 0.0
        %265 = vmatprep.subr.mxu0 0.0
        %266 = vmatpush1.msra.mxu0 0.0
        %267 = vmatprep.subr.mxu0 0.0
        %268 = vmatpush1.msra.mxu0 0.0
        %269 = vmatprep.subr.mxu0 0.0
        %270 = vmatpush1.msra.mxu0 0.0
        %271 = vmatprep.subr.mxu0 0.0
        %272 = vmatpush1.msra.mxu0 0.0
        %273 = vmatprep.subr.mxu0 0.0
        %274 = vmatpush1.msra.mxu0 0.0
        %275 = vmatprep.subr.mxu0 0.0
        %276 = vmatpush1.msra.mxu0 0.0
        %277 = vmatprep.subr.mxu0 0.0
        %278 = vmatpush1.msra.mxu0 0.0
        %279 = vmatprep.subr.mxu0 0.0
        %280 = vmatpush1.msra.mxu0 %v243
        %281 = vmatprep.subr.mxu0 0.0
        %282 = vmatpush2.msra.mxu0 0.0
        %283 = vmatprep.subr.mxu0 0.0
        %284 = vmatpush2.msra.mxu0 0.0
        %285 = vmatprep.subr.mxu0 0.0
        %286 = vmatpush2.msra.mxu0 0.0
        %287 = vmatprep.subr.mxu0 0.0
        %288 = vmatpush2.msra.mxu0 0.0
        %289 = vmatprep.subr.mxu0 0.0
        %290 = vmatpush2.msra.mxu0 0.0
        %291 = vmatprep.subr.mxu0 0.0
        %292 = vmatpush2.msra.mxu0 0.0
        %293 = vmatprep.subr.mxu0 0.0
        %294 = vmatpush2.msra.mxu0 0.0
        %295 = vmatprep.subr.mxu0 0.0
        %296 = vmatpush2.msra.mxu0 0.0
        %297 = vmatprep.subr.mxu0 0.0
        %298 = vmatpush2.msra.mxu0 0.0
        %299 = vmatprep.subr.mxu0 0.0
        %300 = vmatpush2.msra.mxu0 0.0
        %301 = vmatprep.subr.mxu0 0.0
        %302 = vmatpush2.msra.mxu0 0.0
        %303 = vmatprep.subr.mxu0 0.0
        %304 = vmatpush2.msra.mxu0 0.0
        %305 = vmatprep.subr.mxu0 0.0
        %306 = vmatpush2.msra.mxu0 0.0
        %307 = vmatprep.subr.mxu0 0.0
        %308 = vmatpush2.msra.mxu0 0.0
        %309 = vmatprep.subr.mxu0 0.0
        %310 = vmatpush2.msra.mxu0 0.0
        %311 = vmatprep.subr.mxu0 0.0
        %312 = vmatpush2.msra.mxu0 0.0
        %313 = vmatprep.mubr.f32.mxu0 0.0
        %314 = vmatmul.mubr.f32.gmra.mxu0 %v247
        %v315 = vpop.f32.mrf.mxu0
        %v316 = vadd.f32 0.0, %v315
        %v317 = vpop.f32.mrf.mxu0
        %318 = vdwg.mxu0
        %v320 = vrot.slane %v316, 7
        %vm322 = vcmp.gt.f32.partialorder %v316, %v320
        %v323 = vld [vmem:[%s2] sm:$0xff]
        %v324 = vsel %vm322, 1, 0
        %v325 = vlaneseq
        %v326 = vshrl.u32 %v325, 7
        %v327 = vsub.s32 1, %v326
        %v328 = vrot.slane %v324, %v327
        %vm329 = vcmp.eq.s32.totalorder %v328, 1
        %331 = vset.pattern.permute.xlu0 1
        %332 = vperm.xlu0 %331, %v323
        %v333 = vpop.permute.xlu0 %332
        %335 = vset.pattern.permute.xlu0 0
        %336 = vperm.xlu0 %335, %v323
        %v337 = vpop.permute.xlu0 %336
        %v339 = vsel %vm329, %v333, %v337
        %v340 = vsub.f32 %v243, %v339
        %s341 = scalar_lea.vmem %s1, 2
        %v342 = vld [vmem:[%s341] sm:$0x3]
        %v344 = vsel %vm245, %v342, 0
        %346 = vmatprep.subr.mxu0 0.0
        %347 = vmatpush1.msra.mxu0 0.0
        %348 = vmatprep.subr.mxu0 0.0
        %349 = vmatpush1.msra.mxu0 0.0
        %350 = vmatprep.subr.mxu0 0.0
        %351 = vmatpush1.msra.mxu0 0.0
        %352 = vmatprep.subr.mxu0 0.0
        %353 = vmatpush1.msra.mxu0 0.0
        %354 = vmatprep.subr.mxu0 0.0
        %355 = vmatpush1.msra.mxu0 0.0
        %356 = vmatprep.subr.mxu0 0.0
        %357 = vmatpush1.msra.mxu0 0.0
        %358 = vmatprep.subr.mxu0 0.0
        %359 = vmatpush1.msra.mxu0 0.0
        %360 = vmatprep.subr.mxu0 0.0
        %361 = vmatpush1.msra.mxu0 0.0
        %362 = vmatprep.subr.mxu0 0.0
        %363 = vmatpush1.msra.mxu0 0.0
        %364 = vmatprep.subr.mxu0 0.0
        %365 = vmatpush1.msra.mxu0 0.0
        %366 = vmatprep.subr.mxu0 0.0
        %367 = vmatpush1.msra.mxu0 0.0
        %368 = vmatprep.subr.mxu0 0.0
        %369 = vmatpush1.msra.mxu0 0.0
        %370 = vmatprep.subr.mxu0 0.0
        %371 = vmatpush1.msra.mxu0 0.0
        %372 = vmatprep.subr.mxu0 0.0
        %373 = vmatpush1.msra.mxu0 0.0
        %374 = vmatprep.subr.mxu0 0.0
        %375 = vmatpush1.msra.mxu0 0.0
        %376 = vmatprep.subr.mxu0 0.0
        %377 = vmatpush1.msra.mxu0 %v340
        %378 = vmatprep.subr.mxu0 0.0
        %379 = vmatpush2.msra.mxu0 0.0
        %380 = vmatprep.subr.mxu0 0.0
        %381 = vmatpush2.msra.mxu0 0.0
        %382 = vmatprep.subr.mxu0 0.0
        %383 = vmatpush2.msra.mxu0 0.0
        %384 = vmatprep.subr.mxu0 0.0
        %385 = vmatpush2.msra.mxu0 0.0
        %386 = vmatprep.subr.mxu0 0.0
        %387 = vmatpush2.msra.mxu0 0.0
        %388 = vmatprep.subr.mxu0 0.0
        %389 = vmatpush2.msra.mxu0 0.0
        %390 = vmatprep.subr.mxu0 0.0
        %391 = vmatpush2.msra.mxu0 0.0
        %392 = vmatprep.subr.mxu0 0.0
        %393 = vmatpush2.msra.mxu0 0.0
        %394 = vmatprep.subr.mxu0 0.0
        %395 = vmatpush2.msra.mxu0 0.0
        %396 = vmatprep.subr.mxu0 0.0
        %397 = vmatpush2.msra.mxu0 0.0
        %398 = vmatprep.subr.mxu0 0.0
        %399 = vmatpush2.msra.mxu0 0.0
        %400 = vmatprep.subr.mxu0 0.0
        %401 = vmatpush2.msra.mxu0 0.0
        %402 = vmatprep.subr.mxu0 0.0
        %403 = vmatpush2.msra.mxu0 0.0
        %404 = vmatprep.subr.mxu0 0.0
        %405 = vmatpush2.msra.mxu0 0.0
        %406 = vmatprep.subr.mxu0 0.0
        %407 = vmatpush2.msra.mxu0 0.0
        %408 = vmatprep.subr.mxu0 0.0
        %409 = vmatpush2.msra.mxu0 0.0
        %410 = vmatprep.mubr.f32.mxu0 0.0
        %411 = vmatmul.mubr.f32.gmra.mxu0 %v344
        %v412 = vpop.f32.mrf.mxu0
        %v413 = vadd.f32 0.0, %v412
        %v414 = vpop.f32.mrf.mxu0
        %415 = vdwg.mxu0
        %v417 = vrot.slane %v413, 7
        %vm419 = vcmp.gt.f32.partialorder %v413, %v417
        %s420 = scalar_lea.vmem %s2, 8
        %v421 = vld [vmem:[%s420] sm:$0xff]
        %v422 = vsel %vm419, 1, 0
        %v423 = vlaneseq
        %v424 = vshrl.u32 %v423, 7
        %v425 = vsub.s32 1, %v424
        %v426 = vrot.slane %v422, %v425
        %vm427 = vcmp.eq.s32.totalorder %v426, 1
        %429 = vset.pattern.permute.xlu0 1
        %430 = vperm.xlu0 %429, %v421
        %v431 = vpop.permute.xlu0 %430
        %433 = vset.pattern.permute.xlu0 0
        %434 = vperm.xlu0 %433, %v421
        %v435 = vpop.permute.xlu0 %434
        %v437 = vsel %vm427, %v431, %v435
        %v438 = vsub.f32 %v340, %v437
        %v439 = vsub.f32 %v243, %v438
        %440 = vst [vmem:[%s236] sm:$0xff] %v439
        %v441 = vrot.slane %v324, 1
        %vm442 = vcmask 1040384
        %v443 = vsel %vm442, %v441, %v422
        %v444 = vpack.c.b16 %v443, %v443
        %v445 = vpack.c.b8 %v444, %v444
        %vm446 = vcmask 1040384
        %vm447 = vsmask.f32 256
        %vm448 = vmand %vm446, %vm447
        %v449 = vld [vmem:[%s242] sm:$0x1]
        %v450 = vsel %vm448, %v445, %v449
        %451 = vst [vmem:[%s242] sm:$0x1] %v450
        %s452 = sand.u32 %s117, 1
        %s453 = scalar_lea.sflag [#allocation4], %s452
        %s454 = sand.u32 %s117, 1
        %s455 = smul.addr %s454, 8
        %s456 = scalar_lea.vmem [#allocation5], %s455
        %s457 = sand.u32 %s145, 1
        %s458 = scalar_lea.sflag [#allocation7], %s457
        %s459 = sand.u32 %s145, 1
        %s460 = scalar_lea.vmem [#allocation6], %s459
        // Predicated region
        $region37: #{tpu_custom_call.1} parent=31 // pred_check
          %p461 = pneg %p127
        $region38: #{tpu_custom_call.1} parent=31 // pred_check_branch
          %463 = sbr.rel (%p461) target = $region40
        $region39: #{tpu_custom_call.1} parent=31 // pred_region
          %s465 = ssub.s32 128, 128
          %466 = vsyncadd %s453, %s465
          %s467 = smul.addr %s29, 4
          %s468 = sadd.s32 %s30, %s467
          %s469 = smul.addr %s468, 128
          %s470 = scalar_lea.hbm %s3, %s469
          %s472 = sshll.u32 %s456, 4
          %s473 = int_to_ptr.vmem [resolvable:$true] %s472
          %475 = dma.vmem_to_hbm [thread:$0]  %s473, 128, %s470, %s453
        $region40: #{tpu_custom_call.1} parent=31 // pred_fallthru
          _
        // Predicated region
        $region41: #{tpu_custom_call.1} parent=31 // pred_check
          %p476 = pneg %p155
        $region42: #{tpu_custom_call.1} parent=31 // pred_check_branch
          %478 = sbr.rel (%p476) target = $region44
        $region43: #{tpu_custom_call.1} parent=31 // pred_region
          %s480 = ssub.s32 16, 16
          %481 = vsyncadd %s458, %s480
          %s482 = smul.addr %s29, 4
          %s483 = sadd.s32 %s30, %s482
          %s484 = smul.addr %s483, 16
          %s485 = scalar_lea.hbm %s4, %s484
          %s487 = sshll.u32 %s460, 4
          %s488 = int_to_ptr.vmem [resolvable:$true] %s487
          %490 = dma.vmem_to_hbm [thread:$0]  %s488, 16, %s485, %s458
        $region44: #{tpu_custom_call.1} parent=31 // pred_fallthru
          _
      $region32: #{tpu_custom_call.1} parent=5 // pred_fallthru
        _
      %p491 = scmp.le.s32.totalorder 2, %s20
      // Predicated region
      $region45: #{tpu_custom_call.1} parent=5 // pred_check
        %p492 = pneg %p491
      $region46: #{tpu_custom_call.1} parent=5 // pred_check_branch
        %494 = sbr.rel (%p492) target = $region48
      $region47: #{tpu_custom_call.1} parent=5 // pred_region
        %s495 = ssub.s32 %s20, 2
        // Predicated region
        $region49: #{tpu_custom_call.1} parent=47 // pred_check
          %p496 = pneg %p133
        $region50: #{tpu_custom_call.1} parent=47 // pred_check_branch
          %498 = sbr.rel (%p496) target = $region52
        $region51: #{tpu_custom_call.1} parent=47 // pred_region
          %s499 = sand.u32 %s118, 1
          %s500 = scalar_lea.sflag [#allocation4], %s499
          %s501 = sand.u32 %s118, 1
          %s502 = smul.addr %s501, 8
          %s503 = scalar_lea.vmem [#allocation5], %s502
          %504 = dma.done %s500, 128
        $region52: #{tpu_custom_call.1} parent=47 // pred_fallthru
          _
        // Predicated region
        $region53: #{tpu_custom_call.1} parent=47 // pred_check
          %p505 = pneg %p161
        $region54: #{tpu_custom_call.1} parent=47 // pred_check_branch
          %507 = sbr.rel (%p505) target = $region56
        $region55: #{tpu_custom_call.1} parent=47 // pred_region
          %s508 = sand.u32 %s146, 1
          %s509 = scalar_lea.sflag [#allocation7], %s508
          %s510 = sand.u32 %s146, 1
          %s511 = scalar_lea.vmem [#allocation6], %s510
          %512 = dma.done %s509, 16
        $region56: #{tpu_custom_call.1} parent=47 // pred_fallthru
          _
      $region48: #{tpu_custom_call.1} parent=5 // pred_fallthru
        _
    $region6: #{tpu_custom_call.1} parent=1 // loop_footer
      %s24 = sadd.s32 1, %s20
    $region7: #{tpu_custom_call.1} parent=1 // loop_footer_branch
      %19 = sbr.rel target = $region3
    $region8: #{tpu_custom_call.1} parent=1 // loop_exit
      _
    %513 = vsyncpa [#allocation3], 1
    %s514 = scalar_lea.sflag [#allocation3], 1
    %515 = vsyncpa %s514, 1
    %516 = vsyncpa [#allocation4], 1
    %s517 = scalar_lea.sflag [#allocation4], 1
    %518 = vsyncpa %s517, 1
    %519 = vsyncpa [#allocation7], 1
    %s520 = scalar_lea.sflag [#allocation7], 1
    %521 = vsyncpa %s520, 1

</llo_original>
